<compile_context>
chip_gen: v6e
topology: v6e:2x2x1
jax: 0.10.0
libtpu: 0.0.40
codegen_flags: <defaults>
</compile_context>

<pallas_src>
import functools
import math

import jax
import jax.numpy as jnp
import numpy as np
from jax.experimental import pallas as pl
from jax.experimental.pallas import tpu as pltpu


# ----------------------------------------------------------------------------
# Fused Pallas kernel
# ----------------------------------------------------------------------------
def _global_regressor_kernel(x_ref, w_ref, b_ref, wf_ref, out_ref, *,
                             n_conv, seq_len):
    """Whole forward in one kernel invocation.

    x_ref:   (Cpad, B*L)           f32   activations, lane-dense batch*length
    w_ref:   (n_conv, Cpad, 3*Cpad) bf16 eq-lr (+gain-folded) tap-stacked weights
    b_ref:   (n_conv, Cpad, 1)     f32   biases
    wf_ref:  (Dpad, Cpad)          bf16  eq-lr (+gain-folded) final 1x1 conv
    out_ref: (Dpad, B*L)           f32
    """
    h = x_ref[...]                                   # (Cpad, B*L) f32
    cpad, bl = h.shape

    # Per-position boundary masks, built once in-kernel and hoisted out of the
    # layer loop (JAX does not CSE broadcasts).  pos == l within each batch.
    pos = jax.lax.broadcasted_iota(jnp.int32, (cpad, bl), 1) % seq_len
    lmask = pos != 0                                 # left neighbour valid
    rmask = pos != seq_len - 1                       # right neighbour valid

    for i in range(n_conv):
        w = w_ref[i]                                 # (Cpad, 3*Cpad) bf16
        b = b_ref[i]                                 # (Cpad, 1) f32

        # Window construction: XLU lane rotations + boolean selects (no
        # multiplies; f32 on the VPU -> v5e-safe).  Stacked along the
        # contraction axis -> a single MXU matmul per layer, one bf16 cast.
        xl = jnp.where(lmask, pltpu.roll(h, shift=1, axis=1), 0.0)       # x[:, l-1]
        xr = jnp.where(rmask, pltpu.roll(h, shift=bl - 1, axis=1), 0.0)  # x[:, l+1]
        stacked = jnp.concatenate([xl, h, xr], axis=0).astype(w.dtype)   # (3*Cpad, B*L)

        y = jnp.dot(w, stacked, preferred_element_type=jnp.float32) + b
        # FusedLeakyReLU; its sqrt(2) gain is folded into the next layer's
        # (or the final conv's) weights at wrapper time.
        h = jnp.maximum(y, 0.2 * y)

    wf = wf_ref[...]                                 # (Dpad, Cpad) bf16
    out = jnp.dot(wf, h.astype(wf.dtype), preferred_element_type=jnp.float32)
    out_ref[...] = out.astype(out_ref.dtype)


# ----------------------------------------------------------------------------
# Wrapper: eq-lr scaling + gain folding + weight packing + one pallas_call
# ----------------------------------------------------------------------------
def _round_up8(n):
    return max(8, ((n + 7) // 8) * 8)


def global_regressor_forward(params, x, *, mxu_dtype=jnp.bfloat16):
    """GlobalRegressor forward.  x: (B, C0, L) -> (B, dim_out, L).

    params = {"convs": [(w_i (C_out,C_in,3), b_i (C_out,)), ...],
              "final_w": (dim_out, C_last, 1)}
    """
    B, C0, L = x.shape
    convs = params["convs"]
    w_final = params["final_w"]
    dim_out, C_last, Kf = w_final.shape
    assert Kf == 1
    n_conv = len(convs)
    assert convs[-1][0].shape[0] == C_last
    BL = B * L
    sqrt2 = math.sqrt(2.0)

    # Uniform padded channel width so all layer weights pack into one slab.
    cpad = _round_up8(max([C0] + [w.shape[0] for w, _ in convs] + [C_last]))
    dpad = _round_up8(dim_out)

    # --- pack weights: (n_conv, Cpad, 3*Cpad) bf16, biases: (n_conv, Cpad, 1) f32
    w_parts, b_parts = [], []
    for i, (w, b) in enumerate(convs):
        C_out, C_in, K = w.shape
        assert K == 3, "GlobalRegressor hidden conv layers use kernel_size=3"
        scale = 1.0 / math.sqrt(C_in * K)            # equalized lr
        if i > 0:
            scale *= sqrt2                           # fold previous layer's gain
        w32 = w.astype(jnp.float32) * scale          # (C_out, C_in, 3)
        taps = [jnp.pad(w32[:, :, k], ((0, cpad - C_out), (0, cpad - C_in)))
                for k in range(3)]                   # tap k pairs with x[:, l-1+k]
        w_parts.append(jnp.concatenate(taps, axis=1)[None])            # (1,Cpad,3*Cpad)
        b_parts.append(jnp.pad(b.astype(jnp.float32),
                               (0, cpad - C_out)).reshape(1, cpad, 1))
    w_stack = jnp.concatenate(w_parts, axis=0).astype(mxu_dtype)
    b_stack = jnp.concatenate(b_parts, axis=0)

    wf = w_final[:, :, 0].astype(jnp.float32) * (sqrt2 / math.sqrt(C_last))
    wf = jnp.pad(wf, ((0, dpad - dim_out), (0, cpad - C_last))).astype(mxu_dtype)

    # --- layout plumbing: (B, C, L) -> lane-dense (Cpad, B*L)
    x2 = jnp.transpose(x, (1, 0, 2)).reshape(C0, BL).astype(jnp.float32)
    x2 = jnp.pad(x2, ((0, cpad - C0), (0, 0)))

    out2 = pl.pallas_call(
        functools.partial(_global_regressor_kernel, n_conv=n_conv, seq_len=L),
        out_shape=jax.ShapeDtypeStruct((dpad, BL), jnp.float32),
        grid_spec=pltpu.PrefetchScalarGridSpec(
            num_scalar_prefetch=0,
            grid=(1,),
            in_specs=[
                pl.BlockSpec((cpad, BL), lambda i: (0, 0)),
                pl.BlockSpec((n_conv, cpad, 3 * cpad), lambda i: (0, 0, 0)),
                pl.BlockSpec((n_conv, cpad, 1), lambda i: (0, 0, 0)),
                pl.BlockSpec((dpad, cpad), lambda i: (0, 0)),
            ],
            out_specs=pl.BlockSpec((dpad, BL), lambda i: (0, 0)),
        ),
        compiler_params=pltpu.CompilerParams(
            dimension_semantics=("arbitrary",),
            vmem_limit_bytes=32 * 1024 * 1024,
        ),
    )(x2, w_stack, b_stack, wf)

    # (Dpad, B*L) -> (B, dim_out, L)
    return jnp.transpose(out2[:dim_out].reshape(dim_out, B, L), (1, 0, 2))


# ----------------------------------------------------------------------------
# Pure-JAX f32 reference (correctness check)
# ----------------------------------------------------------------------------
def _ref_forward(params, x):
    h = x.astype(jnp.float32)
    for w, b in params["convs"]:
        C_out, C_in, K = w.shape
        scale = 1.0 / math.sqrt(C_in * K)
        h = jax.lax.conv_general_dilated(
            h, (w * scale).astype(jnp.float32), window_strides=(1,),
            padding=[(K // 2, K // 2)],
            dimension_numbers=("NCH", "OIH", "NCH"),
            precision=jax.lax.Precision.HIGHEST)
        h = h + b[None, :, None]
        h = jnp.where(h >= 0.0, h, 0.2 * h) * math.sqrt(2.0)
    wf = params["final_w"]
    C_last = wf.shape[1]
    h = jax.lax.conv_general_dilated(
        h, (wf * (1.0 / math.sqrt(C_last))).astype(jnp.float32),
        window_strides=(1,), padding=[(0, 0)],
        dimension_numbers=("NCH", "OIH", "NCH"),
        precision=jax.lax.Precision.HIGHEST)
    return h


# ----------------------------------------------------------------------------
if __name__ == "__main__":
    # GlobalRegressor(n_conv=3, dim_out=6, channels=[4, 8, 16, 32])
    n_conv = 3
    channels = [4, 8, 16, 32]
    dim_out = 6
    B, L = 2, 64          # B*L = 128 -> fully lane-dense activation slabs

    key = jax.random.PRNGKey(0)
    keys = jax.random.split(key, 2 * n_conv + 2)

    convs = []
    for i in range(n_conv):
        w = jax.random.normal(keys[2 * i], (channels[i + 1], channels[i], 3),
                              dtype=jnp.float32)
        b = jax.random.normal(keys[2 * i + 1], (channels[i + 1],),
                              dtype=jnp.float32) * 0.1
        convs.append((w, b))
    w_final = jax.random.normal(keys[-2], (dim_out, channels[n_conv], 1),
                                dtype=jnp.float32)
    params = {"convs": convs, "final_w": w_final}

    x = jax.random.normal(keys[-1], (B, channels[0], L), dtype=jnp.float32)

    out = jax.jit(global_regressor_forward)(params, x)
    out = jax.block_until_ready(out)

    ref = _ref_forward(params, x)
    assert out.shape == (B, dim_out, L)
    # bf16 MXU operands vs f32 reference -> slightly relaxed tolerance; any
    # structural bug (wrong tap / mask / scale / gain fold) would be O(1) error.
    np.testing.assert_allclose(np.asarray(out), np.asarray(ref),
                               rtol=2e-2, atol=3e-2)

    print("KERNEL_OK")
</pallas_src>

<mosaic_0001>
module attributes {stable_mosaic.version = 11 : i64} {
  func.func @_global_regressor_kernel(%arg0: i32, %arg1: memref<32x128xf32, #tpu.memory_space<vmem>>, %arg2: memref<3x32x96xbf16, #tpu.memory_space<vmem>>, %arg3: memref<3x32x1xf32, #tpu.memory_space<vmem>>, %arg4: memref<8x32xbf16, #tpu.memory_space<vmem>>, %arg5: memref<8x128xf32, #tpu.memory_space<vmem>>) attributes {dimension_semantics = [#tpu.dimension_semantics<arbitrary>], iteration_bounds = array<i64: 1>, scalar_prefetch = 0 : i64, scratch_operands = 0 : i64, tpu.core_type = #tpu.core_type<tc>, window_params = [{pipeline_mode = #tpu.pipeline_mode<synchronous>, transform_indices = @transform_0, window_bounds = array<i64: 32, 128>}, {pipeline_mode = #tpu.pipeline_mode<synchronous>, transform_indices = @transform_1, window_bounds = array<i64: 3, 32, 96>}, {pipeline_mode = #tpu.pipeline_mode<synchronous>, transform_indices = @transform_2, window_bounds = array<i64: 3, 32, 1>}, {pipeline_mode = #tpu.pipeline_mode<synchronous>, transform_indices = @transform_3, window_bounds = array<i64: 8, 32>}, {pipeline_mode = #tpu.pipeline_mode<synchronous>, transform_indices = @transform_4, window_bounds = array<i64: 8, 128>}]} {
    %c0 = arith.constant 0 : index
    %c0_0 = arith.constant 0 : index
    %0 = vector.load %arg1[%c0, %c0_0] : memref<32x128xf32, #tpu.memory_space<vmem>>, vector<32x128xf32>
    %1 = tpu.iota {dimensions = array<i32: 1>} : vector<32x128xi32>
    %c64_i32 = arith.constant 64 : i32
    %c0_i32 = arith.constant 0 : i32
    %2 = arith.cmpi eq, %c64_i32, %c0_i32 : i32
    %c1_i32 = arith.constant 1 : i32
    %3 = arith.select %2, %c1_i32, %c64_i32 : i32
    %4 = vector.broadcast %3 : i32 to vector<32x128xi32>
    %5 = arith.remsi %1, %4 : vector<32x128xi32>
    %c0_i32_1 = arith.constant 0 : i32
    %6 = vector.broadcast %c0_i32_1 : i32 to vector<32x128xi32>
    %7 = arith.cmpi ne, %5, %6 : vector<32x128xi32>
    %c0_i32_2 = arith.constant 0 : i32
    %8 = vector.broadcast %c0_i32_2 : i32 to vector<32x128xi32>
    %9 = arith.cmpi slt, %5, %8 : vector<32x128xi32>
    %c0_i32_3 = arith.constant 0 : i32
    %10 = arith.cmpi slt, %3, %c0_i32_3 : i32
    %11 = vector.broadcast %10 : i1 to vector<32x128xi1>
    %12 = vector.broadcast %11 : vector<32x128xi1> to vector<32x128xi1>
    %13 = arith.xori %9, %12 : vector<32x128xi1>
    %14 = arith.andi %13, %7 : vector<32x128xi1>
    %15 = vector.broadcast %3 : i32 to vector<32x128xi32>
    %16 = arith.addi %5, %15 : vector<32x128xi32>
    %17 = arith.select %14, %16, %5 : vector<32x128xi1>, vector<32x128xi32>
    %c0_i32_4 = arith.constant 0 : i32
    %18 = vector.broadcast %c0_i32_4 : i32 to vector<32x128xi32>
    %19 = arith.cmpi ne, %17, %18 : vector<32x128xi32>
    %c63_i32 = arith.constant 63 : i32
    %20 = vector.broadcast %c63_i32 : i32 to vector<32x128xi32>
    %21 = arith.cmpi ne, %17, %20 : vector<32x128xi32>
    %c0_5 = arith.constant 0 : index
    %c0_6 = arith.constant 0 : index
    %c0_7 = arith.constant 0 : index
    %22 = vector.load %arg2[%c0_5, %c0_6, %c0_7] : memref<3x32x96xbf16, #tpu.memory_space<vmem>>, vector<1x32x96xbf16>
    %23 = vector.shape_cast %22 : vector<1x32x96xbf16> to vector<32x96xbf16>
    %c0_8 = arith.constant 0 : index
    %c0_9 = arith.constant 0 : index
    %c0_10 = arith.constant 0 : index
    %24 = vector.load %arg3[%c0_8, %c0_9, %c0_10] : memref<3x32x1xf32, #tpu.memory_space<vmem>>, vector<1x32x1xf32>
    %25 = vector.shape_cast %24 : vector<1x32x1xf32> to vector<32x1xf32>
    %c1_i32_11 = arith.constant 1 : i32
    %26 = tpu.dynamic_rotate %0 by %c1_i32_11 dim 1 : vector<32x128xf32>, i32 -> vector<32x128xf32>
    %cst = arith.constant 0.000000e+00 : f32
    %27 = vector.broadcast %cst : f32 to vector<32x128xf32>
    %28 = arith.select %19, %26, %27 : vector<32x128xi1>, vector<32x128xf32>
    %c127_i32 = arith.constant 127 : i32
    %29 = tpu.dynamic_rotate %0 by %c127_i32 dim 1 : vector<32x128xf32>, i32 -> vector<32x128xf32>
    %cst_12 = arith.constant 0.000000e+00 : f32
    %30 = vector.broadcast %cst_12 : f32 to vector<32x128xf32>
    %31 = arith.select %21, %29, %30 : vector<32x128xi1>, vector<32x128xf32>
    %32 = tpu.concatenate %28, %0, %31 in 0 : vector<32x128xf32>, vector<32x128xf32>, vector<32x128xf32> -> vector<96x128xf32>
    %33 = arith.truncf %32 : vector<96x128xf32> to vector<96x128xbf16>
    %cst_13 = arith.constant dense<0.000000e+00> : vector<32x128xf32>
    %34 = tpu.matmul %23, %33, %cst_13 {dimension_numbers = #tpu.dot_dimension_numbers<[1], [0], [0], [1], [0, 0, 1, 1], [], []>} : vector<32x96xbf16>, vector<96x128xbf16>, vector<32x128xf32> -> vector<32x128xf32>
    %35 = vector.broadcast %25 : vector<32x1xf32> to vector<32x128xf32>
    %36 = arith.addf %34, %35 : vector<32x128xf32>
    %cst_14 = arith.constant 2.000000e-01 : f32
    %37 = vector.broadcast %cst_14 : f32 to vector<32x128xf32>
    %38 = arith.mulf %37, %36 : vector<32x128xf32>
    %39 = arith.maximumf %36, %38 : vector<32x128xf32>
    %c1 = arith.constant 1 : index
    %c0_15 = arith.constant 0 : index
    %c0_16 = arith.constant 0 : index
    %40 = vector.load %arg2[%c1, %c0_15, %c0_16] : memref<3x32x96xbf16, #tpu.memory_space<vmem>>, vector<1x32x96xbf16>
    %41 = vector.shape_cast %40 : vector<1x32x96xbf16> to vector<32x96xbf16>
    %c1_17 = arith.constant 1 : index
    %c0_18 = arith.constant 0 : index
    %c0_19 = arith.constant 0 : index
    %42 = vector.load %arg3[%c1_17, %c0_18, %c0_19] : memref<3x32x1xf32, #tpu.memory_space<vmem>>, vector<1x32x1xf32>
    %43 = vector.shape_cast %42 : vector<1x32x1xf32> to vector<32x1xf32>
    %c1_i32_20 = arith.constant 1 : i32
    %44 = tpu.dynamic_rotate %39 by %c1_i32_20 dim 1 : vector<32x128xf32>, i32 -> vector<32x128xf32>
    %cst_21 = arith.constant 0.000000e+00 : f32
    %45 = vector.broadcast %cst_21 : f32 to vector<32x128xf32>
    %46 = arith.select %19, %44, %45 : vector<32x128xi1>, vector<32x128xf32>
    %c127_i32_22 = arith.constant 127 : i32
    %47 = tpu.dynamic_rotate %39 by %c127_i32_22 dim 1 : vector<32x128xf32>, i32 -> vector<32x128xf32>
    %cst_23 = arith.constant 0.000000e+00 : f32
    %48 = vector.broadcast %cst_23 : f32 to vector<32x128xf32>
    %49 = arith.select %21, %47, %48 : vector<32x128xi1>, vector<32x128xf32>
    %50 = tpu.concatenate %46, %39, %49 in 0 : vector<32x128xf32>, vector<32x128xf32>, vector<32x128xf32> -> vector<96x128xf32>
    %51 = arith.truncf %50 : vector<96x128xf32> to vector<96x128xbf16>
    %cst_24 = arith.constant dense<0.000000e+00> : vector<32x128xf32>
    %52 = tpu.matmul %41, %51, %cst_24 {dimension_numbers = #tpu.dot_dimension_numbers<[1], [0], [0], [1], [0, 0, 1, 1], [], []>} : vector<32x96xbf16>, vector<96x128xbf16>, vector<32x128xf32> -> vector<32x128xf32>
    %53 = vector.broadcast %43 : vector<32x1xf32> to vector<32x128xf32>
    %54 = arith.addf %52, %53 : vector<32x128xf32>
    %cst_25 = arith.constant 2.000000e-01 : f32
    %55 = vector.broadcast %cst_25 : f32 to vector<32x128xf32>
    %56 = arith.mulf %55, %54 : vector<32x128xf32>
    %57 = arith.maximumf %54, %56 : vector<32x128xf32>
    %c2 = arith.constant 2 : index
    %c0_26 = arith.constant 0 : index
    %c0_27 = arith.constant 0 : index
    %58 = vector.load %arg2[%c2, %c0_26, %c0_27] : memref<3x32x96xbf16, #tpu.memory_space<vmem>>, vector<1x32x96xbf16>
    %59 = vector.shape_cast %58 : vector<1x32x96xbf16> to vector<32x96xbf16>
    %c2_28 = arith.constant 2 : index
    %c0_29 = arith.constant 0 : index
    %c0_30 = arith.constant 0 : index
    %60 = vector.load %arg3[%c2_28, %c0_29, %c0_30] : memref<3x32x1xf32, #tpu.memory_space<vmem>>, vector<1x32x1xf32>
    %61 = vector.shape_cast %60 : vector<1x32x1xf32> to vector<32x1xf32>
    %c1_i32_31 = arith.constant 1 : i32
    %62 = tpu.dynamic_rotate %57 by %c1_i32_31 dim 1 : vector<32x128xf32>, i32 -> vector<32x128xf32>
    %cst_32 = arith.constant 0.000000e+00 : f32
    %63 = vector.broadcast %cst_32 : f32 to vector<32x128xf32>
    %64 = arith.select %19, %62, %63 : vector<32x128xi1>, vector<32x128xf32>
    %c127_i32_33 = arith.constant 127 : i32
    %65 = tpu.dynamic_rotate %57 by %c127_i32_33 dim 1 : vector<32x128xf32>, i32 -> vector<32x128xf32>
    %cst_34 = arith.constant 0.000000e+00 : f32
    %66 = vector.broadcast %cst_34 : f32 to vector<32x128xf32>
    %67 = arith.select %21, %65, %66 : vector<32x128xi1>, vector<32x128xf32>
    %68 = tpu.concatenate %64, %57, %67 in 0 : vector<32x128xf32>, vector<32x128xf32>, vector<32x128xf32> -> vector<96x128xf32>
    %69 = arith.truncf %68 : vector<96x128xf32> to vector<96x128xbf16>
    %cst_35 = arith.constant dense<0.000000e+00> : vector<32x128xf32>
    %70 = tpu.matmul %59, %69, %cst_35 {dimension_numbers = #tpu.dot_dimension_numbers<[1], [0], [0], [1], [0, 0, 1, 1], [], []>} : vector<32x96xbf16>, vector<96x128xbf16>, vector<32x128xf32> -> vector<32x128xf32>
    %71 = vector.broadcast %61 : vector<32x1xf32> to vector<32x128xf32>
    %72 = arith.addf %70, %71 : vector<32x128xf32>
    %cst_36 = arith.constant 2.000000e-01 : f32
    %73 = vector.broadcast %cst_36 : f32 to vector<32x128xf32>
    %74 = arith.mulf %73, %72 : vector<32x128xf32>
    %75 = arith.maximumf %72, %74 : vector<32x128xf32>
    %c0_37 = arith.constant 0 : index
    %c0_38 = arith.constant 0 : index
    %76 = vector.load %arg4[%c0_37, %c0_38] : memref<8x32xbf16, #tpu.memory_space<vmem>>, vector<8x32xbf16>
    %77 = arith.truncf %75 : vector<32x128xf32> to vector<32x128xbf16>
    %cst_39 = arith.constant dense<0.000000e+00> : vector<8x128xf32>
    %78 = tpu.matmul %76, %77, %cst_39 {dimension_numbers = #tpu.dot_dimension_numbers<[1], [0], [0], [1], [0, 0, 1, 1], [], []>} : vector<8x32xbf16>, vector<32x128xbf16>, vector<8x128xf32> -> vector<8x128xf32>
    %c0_40 = arith.constant 0 : index
    %c0_41 = arith.constant 0 : index
    %79 = vector.load %arg5[%c0_40, %c0_41] : memref<8x128xf32, #tpu.memory_space<vmem>>, vector<8x128xf32>
    tpu.vector_store %arg5[%c0_40, %c0_41], %78 {strides = array<i32>} : memref<8x128xf32, #tpu.memory_space<vmem>>, vector<8x128xf32>,
    return
  }
  func.func @transform_0(%arg0: i32) -> (i32, i32) {
    %c0_i32 = arith.constant 0 : i32
    %c0_i32_0 = arith.constant 0 : i32
    %c0_i32_1 = arith.constant 0 : i32
    return %c0_i32, %c0_i32_0 : i32, i32
  }
  func.func @transform_1(%arg0: i32) -> (i32, i32, i32) {
    %c0_i32 = arith.constant 0 : i32
    %c0_i32_0 = arith.constant 0 : i32
    %c0_i32_1 = arith.constant 0 : i32
    %c0_i32_2 = arith.constant 0 : i32
    return %c0_i32, %c0_i32_0, %c0_i32_1 : i32, i32, i32
  }
  func.func @transform_2(%arg0: i32) -> (i32, i32, i32) {
    %c0_i32 = arith.constant 0 : i32
    %c0_i32_0 = arith.constant 0 : i32
    %c0_i32_1 = arith.constant 0 : i32
    %c0_i32_2 = arith.constant 0 : i32
    return %c0_i32, %c0_i32_0, %c0_i32_1 : i32, i32, i32
  }
  func.func @transform_3(%arg0: i32) -> (i32, i32) {
    %c0_i32 = arith.constant 0 : i32
    %c0_i32_0 = arith.constant 0 : i32
    %c0_i32_1 = arith.constant 0 : i32
    return %c0_i32, %c0_i32_0 : i32, i32
  }
  func.func @transform_4(%arg0: i32) -> (i32, i32) {
    %c0_i32 = arith.constant 0 : i32
    %c0_i32_0 = arith.constant 0 : i32
    %c0_i32_1 = arith.constant 0 : i32
    return %c0_i32, %c0_i32_0 : i32, i32
  }
}

</mosaic_0001>

<llo_original>
// kernel: global_regressor_forward.1
$region0: #{global_regressor_forward.1}
  #allocation0 [shape = 'u32[]', space=smem, size = 0x4, offset = 0x4, fixed_abs, tag = 'smem constant byte address 0x4 - core index']
  #allocation1 [shape = 'u32[144,128]{1,0:T(1,128)}', space=vmem, size = 0x12000, scoped, tag = 'internal scratch']
  %s0 = inlined_call_operand.vmem [shape: f32[32,128], index: 0, kind: input, shape index: {}]
  %s1 = inlined_call_operand.vmem [shape: bf16[3,32,96], index: 1, kind: input, shape index: {}]
  %s2 = inlined_call_operand.vmem [shape: f32[3,32,1], index: 2, kind: input, shape index: {}]
  %s3 = inlined_call_operand.vmem [shape: bf16[8,32], index: 3, kind: input, shape index: {}]
  %s4 = inlined_call_operand.vmem [shape: f32[8,128], index: 4, kind: output, shape index: {}]
  %s5 = sld [smem:[#allocation0]]
  $region26: #{global_regressor_forward.1} parent=0
    _
  %s7 = ssub.s32 1, %s5
  %s8 = scalar_select 0, %s7, %s5
  // Predicated region
  $region2: #{global_regressor_forward.1} parent=0 // pred_check
    _
  $region3: #{global_regressor_forward.1} parent=0 // pred_check_branch
    %10 = sbr.rel (0) target = $region5
  $region4: #{global_regressor_forward.1} parent=0 // pred_region
    _
  $region5: #{global_regressor_forward.1} parent=0 // pred_fallthru
    _
  // Predicated region
  $region6: #{global_regressor_forward.1} parent=0 // pred_check
    _
  $region7: #{global_regressor_forward.1} parent=0 // pred_check_branch
    %12 = sbr.rel (0) target = $region9
  $region8: #{global_regressor_forward.1} parent=0 // pred_region
    _
  $region9: #{global_regressor_forward.1} parent=0 // pred_fallthru
    _
  // Predicated region
  $region10: #{global_regressor_forward.1} parent=0 // pred_check
    _
  $region11: #{global_regressor_forward.1} parent=0 // pred_check_branch
    %14 = sbr.rel (0) target = $region13
  $region12: #{global_regressor_forward.1} parent=0 // pred_region
    _
  $region13: #{global_regressor_forward.1} parent=0 // pred_fallthru
    _
  // Predicated region
  $region14: #{global_regressor_forward.1} parent=0 // pred_check
    _
  $region15: #{global_regressor_forward.1} parent=0 // pred_check_branch
    %16 = sbr.rel (0) target = $region17
  $region16: #{global_regressor_forward.1} parent=0 // pred_region
    _
  $region17: #{global_regressor_forward.1} parent=0 // pred_fallthru
    _
  %v18 = vld [vmem:[%s0] sm:$0xff]
  %v19 = vld [vmem:[%s0 + $0x8] sm:$0xff]
  %v20 = vld [vmem:[%s0 + $0x10] sm:$0xff]
  %v21 = vld [vmem:[%s0 + $0x18] sm:$0xff]
  %v22 = vlaneseq
  %v23 = vand.u32 %v22, 127
  %vm24 = vcmp.lt.s32.totalorder %v23, 0
  %v25 = vsub.s32 0, %v23
  %v26 = vsel %vm24, %v25, %v23
  %v27 = vshrl.u32 %v26, 6
  %v28 = vand.u32 %v26, 63
  %v29 = vsub.s32 0, %v28
  %v30 = vsel %vm24, %v29, %v28
  %vm31 = vcmp.ne.s32.totalorder %v30, 0
  %vm32 = vcmp.lt.s32.totalorder %v30, 0
  %vm33 = vmand %vm32, %vm31
  %v34 = vadd.s32 %v30, 64
  %v35 = vsel %vm33, %v34, %v30
  %vm36 = vcmp.ne.s32.totalorder %v35, 0
  %vm37 = vcmp.ne.s32.totalorder %v35, 63
  %v38 = vld [vmem:[%s1] sm:$0xf]
  %v39 = vld [vmem:[%s1 + $0x4] sm:$0xf]
  %v40 = vld [vmem:[%s1 + $0x8] sm:$0xf]
  %v41 = vld [vmem:[%s1 + $0xc] sm:$0xf]
  %v42 = vld [vmem:[%s2] sm:$0xff]
  %v43 = vld [vmem:[%s2 + $0x8] sm:$0xff]
  %v44 = vld [vmem:[%s2 + $0x10] sm:$0xff]
  %v45 = vld [vmem:[%s2 + $0x18] sm:$0xff]
  %46 = vrot.lane.b32.xlu0 %v18, 1
  %v47 = vpop.permute.xlu0 %46
  %48 = vrot.lane.b32.xlu0 %v19, 1
  %v49 = vpop.permute.xlu0 %48
  %50 = vrot.lane.b32.xlu0 %v20, 1
  %v51 = vpop.permute.xlu0 %50
  %52 = vrot.lane.b32.xlu0 %v21, 1
  %v53 = vpop.permute.xlu0 %52
  %v54 = vsel %vm36, %v47, 0.0
  %v55 = vsel %vm36, %v49, 0.0
  %v56 = vsel %vm36, %v51, 0.0
  %v57 = vsel %vm36, %v53, 0.0
  %58 = vrot.lane.b32.xlu0 %v18, 127
  %v59 = vpop.permute.xlu0 %58
  %60 = vrot.lane.b32.xlu0 %v19, 127
  %v61 = vpop.permute.xlu0 %60
  %62 = vrot.lane.b32.xlu0 %v20, 127
  %v63 = vpop.permute.xlu0 %62
  %64 = vrot.lane.b32.xlu0 %v21, 127
  %v65 = vpop.permute.xlu0 %64
  %v66 = vsel %vm37, %v59, 0.0
  %v67 = vsel %vm37, %v61, 0.0
  %v68 = vsel %vm37, %v63, 0.0
  %v69 = vsel %vm37, %v65, 0.0
  %v70 = vpack.c.bf16 %v55, %v54
  %v71 = vpack.c.bf16 %v57, %v56
  %v72 = vpack.c.bf16 %v19, %v18
  %v73 = vpack.c.bf16 %v21, %v20
  %v74 = vpack.c.bf16 %v67, %v66
  %v75 = vpack.c.bf16 %v69, %v68
  %77 = vset.pattern.permute.xlu0 0
  %78 = vperm.xlu0 %77, %v42
  %v79 = vpop.permute.xlu0 %78
  %82 = vset.pattern.permute.xlu0 0
  %83 = vperm.xlu0 %82, %v43
  %v84 = vpop.permute.xlu0 %83
  %87 = vset.pattern.permute.xlu0 0
  %88 = vperm.xlu0 %87, %v44
  %v89 = vpop.permute.xlu0 %88
  %92 = vset.pattern.permute.xlu0 0
  %93 = vperm.xlu0 %92, %v45
  %v94 = vpop.permute.xlu0 %93
  %v100 = vunpack.c.l.b16 %v38
  %v101 = vunpack.c.l.b16 %v39
  %v102 = vunpack.c.l.b16 %v40
  %v103 = vunpack.c.l.b16 %v41
  %v104 = vpack.c.b16 %v101, %v100
  %v105 = vpack.c.b16 %v103, %v102
  %vm106 = vcmask 785408
  %v108 = vsel %vm106, %v104, 0
  %v111 = vsel %vm106, %v105, 0
  %113 = vmatprep.subr.bf16.mxu0 0
  %114 = vmatpush1.bf16.msra.mxu0 0
  %115 = vmatprep.subr.bf16.mxu0 0
  %116 = vmatpush1.bf16.msra.mxu0 0
  %117 = vmatprep.subr.bf16.mxu0 0
  %118 = vmatpush1.bf16.msra.mxu0 %v75
  %119 = vmatprep.subr.bf16.mxu0 0
  %120 = vmatpush1.bf16.msra.mxu0 %v74
  %121 = vmatprep.subr.bf16.mxu0 0
  %122 = vmatpush1.bf16.msra.mxu0 %v73
  %123 = vmatprep.subr.bf16.mxu0 0
  %124 = vmatpush1.bf16.msra.mxu0 %v72
  %125 = vmatprep.subr.bf16.mxu0 0
  %126 = vmatpush1.bf16.msra.mxu0 %v71
  %127 = vmatprep.subr.bf16.mxu0 0
  %128 = vmatpush1.bf16.msra.mxu0 %v70
  %129 = vmatprep.subr.bf16.mxu0 0
  %130 = vmatpush2.bf16.msra.mxu0 0
  %131 = vmatprep.subr.bf16.mxu0 0
  %132 = vmatpush2.bf16.msra.mxu0 0
  %133 = vmatprep.subr.bf16.mxu0 0
  %134 = vmatpush2.bf16.msra.mxu0 0
  %135 = vmatprep.subr.bf16.mxu0 0
  %136 = vmatpush2.bf16.msra.mxu0 0
  %137 = vmatprep.subr.bf16.mxu0 0
  %138 = vmatpush2.bf16.msra.mxu0 0
  %139 = vmatprep.subr.bf16.mxu0 0
  %140 = vmatpush2.bf16.msra.mxu0 0
  %141 = vmatprep.subr.bf16.mxu0 0
  %142 = vmatpush2.bf16.msra.mxu0 0
  %143 = vmatprep.subr.bf16.mxu0 0
  %144 = vmatpush2.bf16.msra.mxu0 0
  %145 = vmatprep.mubr.bf16.mxu0 0
  %146 = vmatmul.mubr.bf16.gmra.mxu0 %v108
  %v147 = vpop.f32.mrf.mxu0
  %v148 = vadd.f32 %v79, %v147
  %v149 = vpop.f32.mrf.mxu0
  %v150 = vpop.f32.mrf.mxu0
  %v151 = vadd.f32 %v84, %v150
  %v152 = vpop.f32.mrf.mxu0
  %153 = vmatprep.mubr.bf16.mxu0 0
  %154 = vmatmul.mubr.bf16.gmra.mxu0 %v111
  %v155 = vpop.f32.mrf.mxu0
  %v156 = vadd.f32 %v89, %v155
  %v157 = vpop.f32.mrf.mxu0
  %v158 = vpop.f32.mrf.mxu0
  %v159 = vadd.f32 %v94, %v158
  %v160 = vpop.f32.mrf.mxu0
  %161 = vdwg.mxu0
  %v162 = vmul.f32 %v148, 0.2
  %v163 = vmul.f32 %v151, 0.2
  %v164 = vmul.f32 %v156, 0.2
  %v165 = vmul.f32 %v159, 0.2
  %v166 = vmax.f32 %v148, %v162
  %v167 = vmax.f32 %v151, %v163
  %v168 = vmax.f32 %v156, %v164
  %v169 = vmax.f32 %v159, %v165
  %s170 = scalar_lea.vmem %s1, 16
  %v171 = vld [vmem:[%s170] sm:$0xf]
  %v172 = vld [vmem:[%s170 + $0x4] sm:$0xf]
  %v173 = vld [vmem:[%s170 + $0x8] sm:$0xf]
  %v174 = vld [vmem:[%s170 + $0xc] sm:$0xf]
  %s175 = scalar_lea.vmem %s2, 32
  %v176 = vld [vmem:[%s175] sm:$0xff]
  %v177 = vld [vmem:[%s175 + $0x8] sm:$0xff]
  %v178 = vld [vmem:[%s175 + $0x10] sm:$0xff]
  %v179 = vld [vmem:[%s175 + $0x18] sm:$0xff]
  %180 = vrot.lane.b32.xlu0 %v166, 1
  %v181 = vpop.permute.xlu0 %180
  %182 = vrot.lane.b32.xlu0 %v167, 1
  %v183 = vpop.permute.xlu0 %182
  %184 = vrot.lane.b32.xlu0 %v168, 1
  %v185 = vpop.permute.xlu0 %184
  %186 = vrot.lane.b32.xlu0 %v169, 1
  %v187 = vpop.permute.xlu0 %186
  %v188 = vsel %vm36, %v181, 0.0
  %v189 = vsel %vm36, %v183, 0.0
  %v190 = vsel %vm36, %v185, 0.0
  %v191 = vsel %vm36, %v187, 0.0
  %192 = vrot.lane.b32.xlu0 %v166, 127
  %v193 = vpop.permute.xlu0 %192
  %194 = vrot.lane.b32.xlu0 %v167, 127
  %v195 = vpop.permute.xlu0 %194
  %196 = vrot.lane.b32.xlu0 %v168, 127
  %v197 = vpop.permute.xlu0 %196
  %198 = vrot.lane.b32.xlu0 %v169, 127
  %v199 = vpop.permute.xlu0 %198
  %v200 = vsel %vm37, %v193, 0.0
  %v201 = vsel %vm37, %v195, 0.0
  %v202 = vsel %vm37, %v197, 0.0
  %v203 = vsel %vm37, %v199, 0.0
  %v204 = vpack.c.bf16 %v189, %v188
  %v205 = vpack.c.bf16 %v191, %v190
  %v206 = vpack.c.bf16 %v167, %v166
  %v207 = vpack.c.bf16 %v169, %v168
  %v208 = vpack.c.bf16 %v201, %v200
  %v209 = vpack.c.bf16 %v203, %v202
  %211 = vset.pattern.permute.xlu0 0
  %212 = vperm.xlu0 %211, %v176
  %v213 = vpop.permute.xlu0 %212
  %216 = vset.pattern.permute.xlu0 0
  %217 = vperm.xlu0 %216, %v177
  %v218 = vpop.permute.xlu0 %217
  %221 = vset.pattern.permute.xlu0 0
  %222 = vperm.xlu0 %221, %v178
  %v223 = vpop.permute.xlu0 %222
  %226 = vset.pattern.permute.xlu0 0
  %227 = vperm.xlu0 %226, %v179
  %v228 = vpop.permute.xlu0 %227
  %v234 = vunpack.c.l.b16 %v171
  %v235 = vunpack.c.l.b16 %v172
  %v236 = vunpack.c.l.b16 %v173
  %v237 = vunpack.c.l.b16 %v174
  %v238 = vpack.c.b16 %v235, %v234
  %v239 = vpack.c.b16 %v237, %v236
  %v241 = vsel %vm106, %v238, 0
  %v244 = vsel %vm106, %v239, 0
  %246 = vmatprep.subr.bf16.mxu0 0
  %247 = vmatpush1.bf16.msra.mxu0 0
  %248 = vmatprep.subr.bf16.mxu0 0
  %249 = vmatpush1.bf16.msra.mxu0 0
  %250 = vmatprep.subr.bf16.mxu0 0
  %251 = vmatpush1.bf16.msra.mxu0 %v209
  %252 = vmatprep.subr.bf16.mxu0 0
  %253 = vmatpush1.bf16.msra.mxu0 %v208
  %254 = vmatprep.subr.bf16.mxu0 0
  %255 = vmatpush1.bf16.msra.mxu0 %v207
  %256 = vmatprep.subr.bf16.mxu0 0
  %257 = vmatpush1.bf16.msra.mxu0 %v206
  %258 = vmatprep.subr.bf16.mxu0 0
  %259 = vmatpush1.bf16.msra.mxu0 %v205
  %260 = vmatprep.subr.bf16.mxu0 0
  %261 = vmatpush1.bf16.msra.mxu0 %v204
  %262 = vmatprep.subr.bf16.mxu0 0
  %263 = vmatpush2.bf16.msra.mxu0 0
  %264 = vmatprep.subr.bf16.mxu0 0
  %265 = vmatpush2.bf16.msra.mxu0 0
  %266 = vmatprep.subr.bf16.mxu0 0
  %267 = vmatpush2.bf16.msra.mxu0 0
  %268 = vmatprep.subr.bf16.mxu0 0
  %269 = vmatpush2.bf16.msra.mxu0 0
  %270 = vmatprep.subr.bf16.mxu0 0
  %271 = vmatpush2.bf16.msra.mxu0 0
  %272 = vmatprep.subr.bf16.mxu0 0
  %273 = vmatpush2.bf16.msra.mxu0 0
  %274 = vmatprep.subr.bf16.mxu0 0
  %275 = vmatpush2.bf16.msra.mxu0 0
  %276 = vmatprep.subr.bf16.mxu0 0
  %277 = vmatpush2.bf16.msra.mxu0 0
  %278 = vmatprep.mubr.bf16.mxu0 0
  %279 = vmatmul.mubr.bf16.gmra.mxu0 %v241
  %v280 = vpop.f32.mrf.mxu0
  %v281 = vadd.f32 %v213, %v280
  %v282 = vpop.f32.mrf.mxu0
  %v283 = vpop.f32.mrf.mxu0
  %v284 = vadd.f32 %v218, %v283
  %v285 = vpop.f32.mrf.mxu0
  %286 = vmatprep.mubr.bf16.mxu0 0
  %287 = vmatmul.mubr.bf16.gmra.mxu0 %v244
  %v288 = vpop.f32.mrf.mxu0
  %v289 = vadd.f32 %v223, %v288
  %v290 = vpop.f32.mrf.mxu0
  %v291 = vpop.f32.mrf.mxu0
  %v292 = vadd.f32 %v228, %v291
  %v293 = vpop.f32.mrf.mxu0
  %294 = vdwg.mxu0
  %v295 = vmul.f32 %v281, 0.2
  %v296 = vmul.f32 %v284, 0.2
  %v297 = vmul.f32 %v289, 0.2
  %v298 = vmul.f32 %v292, 0.2
  %v299 = vmax.f32 %v281, %v295
  %v300 = vmax.f32 %v284, %v296
  %v301 = vmax.f32 %v289, %v297
  %v302 = vmax.f32 %v292, %v298
  %s303 = scalar_lea.vmem %s1, 32
  %v304 = vld [vmem:[%s303] sm:$0xf]
  %v305 = vld [vmem:[%s303 + $0x4] sm:$0xf]
  %v306 = vld [vmem:[%s303 + $0x8] sm:$0xf]
  %v307 = vld [vmem:[%s303 + $0xc] sm:$0xf]
  %s308 = scalar_lea.vmem %s2, 64
  %v309 = vld [vmem:[%s308] sm:$0xff]
  %v310 = vld [vmem:[%s308 + $0x8] sm:$0xff]
  %v311 = vld [vmem:[%s308 + $0x10] sm:$0xff]
  %v312 = vld [vmem:[%s308 + $0x18] sm:$0xff]
  %313 = vrot.lane.b32.xlu0 %v299, 1
  %v314 = vpop.permute.xlu0 %313
  %315 = vrot.lane.b32.xlu0 %v300, 1
  %v316 = vpop.permute.xlu0 %315
  %317 = vrot.lane.b32.xlu0 %v301, 1
  %v318 = vpop.permute.xlu0 %317
  %319 = vrot.lane.b32.xlu0 %v302, 1
  %v320 = vpop.permute.xlu0 %319
  %v321 = vsel %vm36, %v314, 0.0
  %v322 = vsel %vm36, %v316, 0.0
  %v323 = vsel %vm36, %v318, 0.0
  %v324 = vsel %vm36, %v320, 0.0
  %325 = vrot.lane.b32.xlu0 %v299, 127
  %v326 = vpop.permute.xlu0 %325
  %327 = vrot.lane.b32.xlu0 %v300, 127
  %v328 = vpop.permute.xlu0 %327
  %329 = vrot.lane.b32.xlu0 %v301, 127
  %v330 = vpop.permute.xlu0 %329
  %331 = vrot.lane.b32.xlu0 %v302, 127
  %v332 = vpop.permute.xlu0 %331
  %v333 = vsel %vm37, %v326, 0.0
  %v334 = vsel %vm37, %v328, 0.0
  %v335 = vsel %vm37, %v330, 0.0
  %v336 = vsel %vm37, %v332, 0.0
  %v337 = vpack.c.bf16 %v322, %v321
  %v338 = vpack.c.bf16 %v324, %v323
  %v339 = vpack.c.bf16 %v300, %v299
  %v340 = vpack.c.bf16 %v302, %v301
  %v341 = vpack.c.bf16 %v334, %v333
  %v342 = vpack.c.bf16 %v336, %v335
  %344 = vset.pattern.permute.xlu0 0
  %345 = vperm.xlu0 %344, %v309
  %v346 = vpop.permute.xlu0 %345
  %349 = vset.pattern.permute.xlu0 0
  %350 = vperm.xlu0 %349, %v310
  %v351 = vpop.permute.xlu0 %350
  %354 = vset.pattern.permute.xlu0 0
  %355 = vperm.xlu0 %354, %v311
  %v356 = vpop.permute.xlu0 %355
  %359 = vset.pattern.permute.xlu0 0
  %360 = vperm.xlu0 %359, %v312
  %v361 = vpop.permute.xlu0 %360
  %v367 = vunpack.c.l.b16 %v304
  %v368 = vunpack.c.l.b16 %v305
  %v369 = vunpack.c.l.b16 %v306
  %v370 = vunpack.c.l.b16 %v307
  %v371 = vpack.c.b16 %v368, %v367
  %v372 = vpack.c.b16 %v370, %v369
  %v374 = vsel %vm106, %v371, 0
  %v377 = vsel %vm106, %v372, 0
  %379 = vmatprep.subr.bf16.mxu0 0
  %380 = vmatpush1.bf16.msra.mxu0 0
  %381 = vmatprep.subr.bf16.mxu0 0
  %382 = vmatpush1.bf16.msra.mxu0 0
  %383 = vmatprep.subr.bf16.mxu0 0
  %384 = vmatpush1.bf16.msra.mxu0 %v342
  %385 = vmatprep.subr.bf16.mxu0 0
  %386 = vmatpush1.bf16.msra.mxu0 %v341
  %387 = vmatprep.subr.bf16.mxu0 0
  %388 = vmatpush1.bf16.msra.mxu0 %v340
  %389 = vmatprep.subr.bf16.mxu0 0
  %390 = vmatpush1.bf16.msra.mxu0 %v339
  %391 = vmatprep.subr.bf16.mxu0 0
  %392 = vmatpush1.bf16.msra.mxu0 %v338
  %393 = vmatprep.subr.bf16.mxu0 0
  %394 = vmatpush1.bf16.msra.mxu0 %v337
  %395 = vmatprep.subr.bf16.mxu0 0
  %396 = vmatpush2.bf16.msra.mxu0 0
  %397 = vmatprep.subr.bf16.mxu0 0
  %398 = vmatpush2.bf16.msra.mxu0 0
  %399 = vmatprep.subr.bf16.mxu0 0
  %400 = vmatpush2.bf16.msra.mxu0 0
  %401 = vmatprep.subr.bf16.mxu0 0
  %402 = vmatpush2.bf16.msra.mxu0 0
  %403 = vmatprep.subr.bf16.mxu0 0
  %404 = vmatpush2.bf16.msra.mxu0 0
  %405 = vmatprep.subr.bf16.mxu0 0
  %406 = vmatpush2.bf16.msra.mxu0 0
  %407 = vmatprep.subr.bf16.mxu0 0
  %408 = vmatpush2.bf16.msra.mxu0 0
  %409 = vmatprep.subr.bf16.mxu0 0
  %410 = vmatpush2.bf16.msra.mxu0 0
  %411 = vmatprep.mubr.bf16.mxu0 0
  %412 = vmatmul.mubr.bf16.gmra.mxu0 %v374
  %v413 = vpop.f32.mrf.mxu0
  %v414 = vadd.f32 %v346, %v413
  %v415 = vpop.f32.mrf.mxu0
  %v416 = vpop.f32.mrf.mxu0
  %v417 = vadd.f32 %v351, %v416
  %v418 = vpop.f32.mrf.mxu0
  %419 = vmatprep.mubr.bf16.mxu0 0
  %420 = vmatmul.mubr.bf16.gmra.mxu0 %v377
  %v421 = vpop.f32.mrf.mxu0
  %v422 = vadd.f32 %v356, %v421
  %v423 = vpop.f32.mrf.mxu0
  %v424 = vpop.f32.mrf.mxu0
  %v425 = vadd.f32 %v361, %v424
  %v426 = vpop.f32.mrf.mxu0
  %427 = vdwg.mxu0
  %v428 = vmul.f32 %v414, 0.2
  %v429 = vmul.f32 %v417, 0.2
  %v430 = vmul.f32 %v422, 0.2
  %v431 = vmul.f32 %v425, 0.2
  %v432 = vmax.f32 %v414, %v428
  %v433 = vmax.f32 %v417, %v429
  %v434 = vmax.f32 %v422, %v430
  %v435 = vmax.f32 %v425, %v431
  %v436 = vld [vmem:[%s3] sm:$0xf]
  %v437 = vpack.c.bf16 %v433, %v432
  %v438 = vpack.c.bf16 %v435, %v434
  %vm439 = vcmask 261120
  %v441 = vsel %vm439, %v436, 0
  %443 = vmatprep.subr.bf16.mxu0 0
  %444 = vmatpush1.bf16.msra.mxu0 0
  %445 = vmatprep.subr.bf16.mxu0 0
  %446 = vmatpush1.bf16.msra.mxu0 0
  %447 = vmatprep.subr.bf16.mxu0 0
  %448 = vmatpush1.bf16.msra.mxu0 0
  %449 = vmatprep.subr.bf16.mxu0 0
  %450 = vmatpush1.bf16.msra.mxu0 0
  %451 = vmatprep.subr.bf16.mxu0 0
  %452 = vmatpush1.bf16.msra.mxu0 0
  %453 = vmatprep.subr.bf16.mxu0 0
  %454 = vmatpush1.bf16.msra.mxu0 0
  %455 = vmatprep.subr.bf16.mxu0 0
  %456 = vmatpush1.bf16.msra.mxu0 %v438
  %457 = vmatprep.subr.bf16.mxu0 0
  %458 = vmatpush1.bf16.msra.mxu0 %v437
  %459 = vmatprep.subr.bf16.mxu0 0
  %460 = vmatpush2.bf16.msra.mxu0 0
  %461 = vmatprep.subr.bf16.mxu0 0
  %462 = vmatpush2.bf16.msra.mxu0 0
  %463 = vmatprep.subr.bf16.mxu0 0
  %464 = vmatpush2.bf16.msra.mxu0 0
  %465 = vmatprep.subr.bf16.mxu0 0
  %466 = vmatpush2.bf16.msra.mxu0 0
  %467 = vmatprep.subr.bf16.mxu0 0
  %468 = vmatpush2.bf16.msra.mxu0 0
  %469 = vmatprep.subr.bf16.mxu0 0
  %470 = vmatpush2.bf16.msra.mxu0 0
  %471 = vmatprep.subr.bf16.mxu0 0
  %472 = vmatpush2.bf16.msra.mxu0 0
  %473 = vmatprep.subr.bf16.mxu0 0
  %474 = vmatpush2.bf16.msra.mxu0 0
  %475 = vmatprep.mubr.bf16.mxu0 0
  %476 = vmatmul.mubr.bf16.gmra.mxu0 %v441
  %v477 = vpop.f32.mrf.mxu0
  %v478 = vadd.f32 0.0, %v477
  %v479 = vpop.f32.mrf.mxu0
  %v480 = vpop.f32.mrf.mxu0
  %v481 = vpop.f32.mrf.mxu0
  %482 = vdwg.mxu0
  %483 = vst [vmem:[%s4] sm:$0xff] %v478
  // Predicated region
  $region18: #{global_regressor_forward.1} parent=0 // pred_check
    _
  $region19: #{global_regressor_forward.1} parent=0 // pred_check_branch
    %485 = sbr.rel (0) target = $region21
  $region20: #{global_regressor_forward.1} parent=0 // pred_region
    _
  $region21: #{global_regressor_forward.1} parent=0 // pred_fallthru
    _
  // Predicated region
  $region22: #{global_regressor_forward.1} parent=0 // pred_check
    _
  $region23: #{global_regressor_forward.1} parent=0 // pred_check_branch
    %487 = sbr.rel (0) target = $region25
  $region24: #{global_regressor_forward.1} parent=0 // pred_region
    _
  $region25: #{global_regressor_forward.1} parent=0 // pred_fallthru
    _

</llo_original>
